<compile_context>
chip_gen: v7x
topology: tpu7x:2x2x1
jax: 0.10.0
libtpu: 0.0.40
codegen_flags: <defaults>
</compile_context>

<pallas_src>
import functools

import jax
import jax.numpy as jnp
import numpy as np
from jax.experimental import pallas as pl
from jax.experimental.pallas import tpu as pltpu

NEG_POS_RATIO = 4
NEG_FOR_HARD = 100


def _round_up(x, m):
    return ((x + m - 1) // m) * m


def _choose_tiling(n, tile_cap):
    """Pick (tile_n, n_tiles): tile_n a multiple of 128, minimal padding, <= tile_cap."""
    n128 = _round_up(n, 128)
    n_tiles = max(1, -(-n128 // tile_cap))            # cdiv
    tile_n = _round_up(-(-n128 // n_tiles), 128)
    return tile_n, n_tiles


def _run_conf_reduce(yp_bcn, labels_b1n, n_real, tile_n):
    """Per-box cls_loss + negated sort keys, plus per-(batch, tile) partial sums."""
    B, C, Np = yp_bcn.shape
    n_tiles = Np // tile_n
    f32 = jnp.float32

    def kernel(yp_ref, lab_ref, cls_ref, key_ref, numpos_ref, posloss_ref):
        # yp_ref : (1, C, T) f32  — classes on sublanes, boxes on the 128-lane axis
        # lab_ref: (1, 1, T) i32  — per-box class label (exact one-hot assumed)
        # cls_ref, key_ref       : (1, 1, T) f32 lane-dense per-box outputs
        # numpos_ref, posloss_ref: (1, 1, 1, 1) per-(batch, tile) partial sums
        t = pl.program_id(1)

        yp = yp_ref[...]
        lbl = lab_ref[...]

        # y_pred[label] via class-iota compare, then a single log per box (EUP).
        cls_iota = jax.lax.broadcasted_iota(jnp.int32, (1, C, tile_n), 1)
        yp_sel = jnp.sum(jnp.where(cls_iota == lbl, yp, 0.0), axis=1, keepdims=True)
        cls_loss = -jnp.log(jnp.maximum(yp_sel, 1e-7))                  # (1, 1, T)

        bg = (lbl == 0).astype(f32)                                     # background mask
        pos = 1.0 - bg

        # sum of non-background probabilities, masked to background boxes
        max_confs = (jnp.sum(yp, axis=1, keepdims=True) - yp[:, 0:1, :]) * bg

        # Negated key for the ascending sort; padded lanes get a +inf sentinel so
        # they sort strictly after every real box (needed for zero-confidence ties).
        lane = jax.lax.broadcasted_iota(jnp.int32, (1, 1, tile_n), 2) + t * tile_n
        key_ref[...] = jnp.where(lane < n_real, -max_confs, jnp.inf)
        cls_ref[...] = cls_loss

        numpos_ref[...] = jnp.sum(pos).reshape(1, 1, 1, 1)
        posloss_ref[...] = jnp.sum(cls_loss * pos).reshape(1, 1, 1, 1)

    grid_spec = pltpu.PrefetchScalarGridSpec(
        num_scalar_prefetch=0,
        grid=(B, n_tiles),
        in_specs=[
            pl.BlockSpec((1, C, tile_n), lambda b, t: (b, 0, t)),
            pl.BlockSpec((1, 1, tile_n), lambda b, t: (b, 0, t)),
        ],
        out_specs=[
            pl.BlockSpec((1, 1, tile_n), lambda b, t: (b, 0, t)),
            pl.BlockSpec((1, 1, tile_n), lambda b, t: (b, 0, t)),
            pl.BlockSpec((1, 1, 1, 1), lambda b, t: (b, t, 0, 0)),
            pl.BlockSpec((1, 1, 1, 1), lambda b, t: (b, t, 0, 0)),
        ],
    )
    return pl.pallas_call(
        kernel,
        grid_spec=grid_spec,
        out_shape=(
            jax.ShapeDtypeStruct((B, 1, Np), f32),          # cls_loss per box
            jax.ShapeDtypeStruct((B, 1, Np), f32),          # -max_confs (+inf on pad)
            jax.ShapeDtypeStruct((B, n_tiles, 1, 1), f32),  # partial num_pos
            jax.ShapeDtypeStruct((B, n_tiles, 1, 1), f32),  # partial pos_conf_loss
        ),
        compiler_params=pltpu.CompilerParams(
            dimension_semantics=("parallel", "parallel"),
            vmem_limit_bytes=32 * 1024 * 1024,
        ),
    )(yp_bcn, labels_b1n)


@functools.partial(jax.jit, static_argnames=("tile_cap",))
def confidence_loss(y_pred, y_true, tile_cap=8192):
    """Matches ConfidenceLoss.forward for softmax-activated y_pred and exact one-hot
    y_true (the module's documented contract)."""
    B, N, C = y_pred.shape
    tile_n, n_tiles = _choose_tiling(N, tile_cap)
    N_pad = tile_n * n_tiles
    n_pad = N_pad - N

    # lane-dense relayout first, pad on the contiguous last axis afterwards
    yp_bcn = jnp.transpose(y_pred, (0, 2, 1))                           # (B, C, N)
    labels = jnp.argmax(y_true, axis=-1).astype(jnp.int32)              # (B, N)
    if n_pad:
        yp_bcn = jnp.pad(yp_bcn, ((0, 0), (0, 0), (0, n_pad)))          # zero probs
        labels = jnp.pad(labels, ((0, 0), (0, n_pad)))                  # background
    labels = labels.reshape(B, 1, N_pad)

    cls3, key3, numpos_p, posloss_p = _run_conf_reduce(yp_bcn, labels, N, tile_n)
    num_pos = jnp.sum(numpos_p.reshape(B, n_tiles), axis=1)             # (B,)
    pos_conf_loss = jnp.sum(posloss_p.reshape(B, n_tiles), axis=1)      # (B,)

    # hard-negative count (scalar glue, mirrors the torch code; num_boxes = N)
    num_neg = jnp.minimum(NEG_POS_RATIO * num_pos, N - num_pos)
    has_min = jnp.any(num_neg > 0).astype(jnp.float32)
    num_neg_ext = jnp.concatenate(
        [num_neg, jnp.reshape((1.0 - has_min) * NEG_FOR_HARD, (1,))], axis=0)
    num_batch_neg = jnp.sum(
        jnp.where(num_neg_ext > 0, num_neg_ext, 0.0)).astype(jnp.int32)

    # Ascending key/payload sort of the kernel-produced -max_confs keys, then a
    # masked prefix sum == sum of cls_loss over the top-num_batch_neg boxes.
    _, sorted_cls = jax.lax.sort_key_val(key3.reshape(-1), cls3.reshape(-1))
    neg_conf_sum = jnp.sum(
        jnp.where(jnp.arange(B * N_pad) < num_batch_neg, sorted_cls, 0.0))

    num_pos_adj = jnp.where(num_pos != 0, num_pos, jnp.ones_like(num_pos))
    return (jnp.sum(pos_conf_loss) + neg_conf_sum) / jnp.sum(num_pos_adj)


def confidence_loss_reference(y_pred, y_true):
    """Pure-JAX reference mirroring the PyTorch forward (for verification)."""
    B, N, C = y_pred.shape
    cls_loss = -jnp.sum(y_true * jnp.log(jnp.maximum(y_pred, 1e-7)), axis=-1)
    num_pos = jnp.sum(1.0 - y_true[..., 0], axis=-1)
    pos_conf_loss = jnp.sum(cls_loss * (1.0 - y_true[..., 0]), axis=1)
    num_neg = jnp.minimum(NEG_POS_RATIO * num_pos, N - num_pos)
    has_min = jnp.any(num_neg > 0).astype(jnp.float32)
    num_neg_ext = jnp.concatenate(
        [num_neg, jnp.reshape((1.0 - has_min) * NEG_FOR_HARD, (1,))], axis=0)
    k = jnp.sum(jnp.where(num_neg_ext > 0, num_neg_ext, 0.0)).astype(jnp.int32)
    max_confs = (jnp.sum(y_pred[..., 1:], axis=-1) * y_true[..., 0]).reshape(-1)
    _, order = jax.lax.top_k(max_confs, B * N)
    sorted_cls = cls_loss.reshape(-1)[order]
    neg_sum = jnp.sum(jnp.where(jnp.arange(B * N) < k, sorted_cls, 0.0))
    num_pos_adj = jnp.where(num_pos != 0, num_pos, jnp.ones_like(num_pos))
    return (jnp.sum(pos_conf_loss) + neg_sum) / jnp.sum(num_pos_adj)


if __name__ == "__main__":
    # exercises box padding (1200 -> 1280) and, in the second run, multi-tile partials
    B, N, C = 2, 1200, 8
    key = jax.random.PRNGKey(0)
    k1, k2 = jax.random.split(key)

    logits = jax.random.normal(k1, (B, N, C), dtype=jnp.float32)
    y_pred = jax.nn.softmax(logits, axis=-1)                    # softmax-activated preds
    labels = jax.random.randint(k2, (B, N), 0, C)
    y_true = jax.nn.one_hot(labels, C, dtype=jnp.float32)       # one-hot labels

    ref = jax.block_until_ready(confidence_loss_reference(y_pred, y_true))

    # default tiling: one 1280-box block per batch
    out = jax.block_until_ready(confidence_loss(y_pred, y_true))
    np.testing.assert_allclose(np.asarray(out), np.asarray(ref), rtol=2e-5, atol=1e-6)

    # forced small tiles: exercises the multi-tile partial-accumulator path
    out_small = jax.block_until_ready(confidence_loss(y_pred, y_true, tile_cap=512))
    np.testing.assert_allclose(np.asarray(out_small), np.asarray(ref), rtol=2e-5, atol=1e-6)

    print("KERNEL_OK")
</pallas_src>

<mosaic_0001>
module attributes {stable_mosaic.version = 11 : i64} {
  func.func @kernel(%arg0: i32, %arg1: i32, %arg2: memref<1x8x1280xf32, #tpu.memory_space<vmem>>, %arg3: memref<1x1x1280xi32, #tpu.memory_space<vmem>>, %arg4: memref<1x1x1280xf32, #tpu.memory_space<vmem>>, %arg5: memref<1x1x1280xf32, #tpu.memory_space<vmem>>, %arg6: memref<1x1x1x1xf32, #tpu.memory_space<vmem>>, %arg7: memref<1x1x1x1xf32, #tpu.memory_space<vmem>>) attributes {dimension_semantics = [#tpu.dimension_semantics<parallel>, #tpu.dimension_semantics<parallel>], iteration_bounds = array<i64: 2, 1>, scalar_prefetch = 0 : i64, scratch_operands = 0 : i64, tpu.core_type = #tpu.core_type<tc>, window_params = [{transform_indices = @transform_0, window_bounds = array<i64: 1, 8, 1280>}, {transform_indices = @transform_1, window_bounds = array<i64: 1, 1, 1280>}, {transform_indices = @transform_2, window_bounds = array<i64: 1, 1, 1280>}, {transform_indices = @transform_3, window_bounds = array<i64: 1, 1, 1280>}, {transform_indices = @transform_4, window_bounds = array<i64: 1, 1, 1, 1>}, {transform_indices = @transform_5, window_bounds = array<i64: 1, 1, 1, 1>}]} {
    %c0 = arith.constant 0 : index
    %c0_0 = arith.constant 0 : index
    %c0_1 = arith.constant 0 : index
    %0 = vector.load %arg2[%c0, %c0_0, %c0_1] : memref<1x8x1280xf32, #tpu.memory_space<vmem>>, vector<1x8x1280xf32>
    %c0_2 = arith.constant 0 : index
    %c0_3 = arith.constant 0 : index
    %c0_4 = arith.constant 0 : index
    %1 = vector.load %arg3[%c0_2, %c0_3, %c0_4] : memref<1x1x1280xi32, #tpu.memory_space<vmem>>, vector<1x1x1280xi32>
    %2 = tpu.iota {dimensions = array<i32: 1>} : vector<1x8x1280xi32>
    %3 = vector.broadcast %1 : vector<1x1x1280xi32> to vector<1x8x1280xi32>
    %4 = arith.cmpi eq, %2, %3 : vector<1x8x1280xi32>
    %cst = arith.constant 0.000000e+00 : f32
    %5 = vector.broadcast %cst : f32 to vector<1x8x1280xf32>
    %6 = arith.select %4, %0, %5 : vector<1x8x1280xi1>, vector<1x8x1280xf32>
    %cst_5 = arith.constant dense<0.000000e+00> : vector<1x1280xf32>
    %7 = vector.multi_reduction <add>, %6, %cst_5 [1] : vector<1x8x1280xf32> to vector<1x1280xf32>
    %8 = vector.shape_cast %7 : vector<1x1280xf32> to vector<1x1x1280xf32>
    %cst_6 = arith.constant 1.000000e-07 : f32
    %9 = vector.broadcast %cst_6 : f32 to vector<1x1x1280xf32>
    %10 = arith.maximumf %8, %9 : vector<1x1x1280xf32>
    %11 = math.log %10 : vector<1x1x1280xf32>
    %cst_7 = arith.constant 0.000000e+00 : f32
    %12 = vector.broadcast %cst_7 : f32 to vector<1x1x1280xf32>
    %13 = arith.subf %12, %11 : vector<1x1x1280xf32>
    %c0_i32 = arith.constant 0 : i32
    %14 = vector.broadcast %c0_i32 : i32 to vector<1x1x1280xi32>
    %15 = arith.cmpi eq, %1, %14 : vector<1x1x1280xi32>
    %16 = arith.extui %15 : vector<1x1x1280xi1> to vector<1x1x1280xi32>
    %17 = arith.sitofp %16 : vector<1x1x1280xi32> to vector<1x1x1280xf32>
    %cst_8 = arith.constant 1.000000e+00 : f32
    %18 = vector.broadcast %cst_8 : f32 to vector<1x1x1280xf32>
    %19 = arith.subf %18, %17 : vector<1x1x1280xf32>
    %cst_9 = arith.constant dense<0.000000e+00> : vector<1x1280xf32>
    %20 = vector.multi_reduction <add>, %0, %cst_9 [1] : vector<1x8x1280xf32> to vector<1x1280xf32>
    %21 = vector.shape_cast %20 : vector<1x1280xf32> to vector<1x1x1280xf32>
    %22 = vector.extract_strided_slice %0 {offsets = [0, 0, 0], sizes = [1, 1, 1280], strides = [1, 1, 1]} : vector<1x8x1280xf32> to vector<1x1x1280xf32>
    %23 = arith.subf %21, %22 : vector<1x1x1280xf32>
    %24 = arith.mulf %23, %17 : vector<1x1x1280xf32>
    %25 = tpu.iota {dimensions = array<i32: 2>} : vector<1x1x1280xi32>
    %c1280_i32 = arith.constant 1280 : i32
    %26 = arith.muli %arg1, %c1280_i32 : i32
    %27 = vector.broadcast %26 : i32 to vector<1x1x1280xi32>
    %28 = arith.addi %25, %27 : vector<1x1x1280xi32>
    %c1200_i32 = arith.constant 1200 : i32
    %29 = vector.broadcast %c1200_i32 : i32 to vector<1x1x1280xi32>
    %30 = arith.cmpi slt, %28, %29 : vector<1x1x1280xi32>
    %cst_10 = arith.constant 0.000000e+00 : f32
    %31 = vector.broadcast %cst_10 : f32 to vector<1x1x1280xf32>
    %32 = arith.subf %31, %24 : vector<1x1x1280xf32>
    %cst_11 = arith.constant 0x7F800000 : f32
    %33 = vector.broadcast %cst_11 : f32 to vector<1x1x1280xf32>
    %34 = arith.select %30, %32, %33 : vector<1x1x1280xi1>, vector<1x1x1280xf32>
    %c0_12 = arith.constant 0 : index
    %c0_13 = arith.constant 0 : index
    %c0_14 = arith.constant 0 : index
    %35 = vector.load %arg5[%c0_12, %c0_13, %c0_14] : memref<1x1x1280xf32, #tpu.memory_space<vmem>>, vector<1x1x1280xf32>
    tpu.vector_store %arg5[%c0_12, %c0_13, %c0_14], %34 {strides = array<i32>} : memref<1x1x1280xf32, #tpu.memory_space<vmem>>, vector<1x1x1280xf32>,
    %c0_15 = arith.constant 0 : index
    %c0_16 = arith.constant 0 : index
    %c0_17 = arith.constant 0 : index
    %36 = vector.load %arg4[%c0_15, %c0_16, %c0_17] : memref<1x1x1280xf32, #tpu.memory_space<vmem>>, vector<1x1x1280xf32>
    tpu.vector_store %arg4[%c0_15, %c0_16, %c0_17], %13 {strides = array<i32>} : memref<1x1x1280xf32, #tpu.memory_space<vmem>>, vector<1x1x1280xf32>,
    %37 = vector.shape_cast %19 : vector<1x1x1280xf32> to vector<1x1x1x1280xf32>
    %cst_18 = arith.constant dense<0.000000e+00> : vector<1xf32>
    %38 = vector.multi_reduction <add>, %37, %cst_18 [1, 2, 3] : vector<1x1x1x1280xf32> to vector<1xf32>
    %39 = vector.shape_cast %38 : vector<1xf32> to vector<1x1x1x1xf32>
    %40 = vector.extract %39[0, 0, 0, 0] : f32 from vector<1x1x1x1xf32>
    %41 = vector.broadcast %40 : f32 to vector<1x1x1x1xf32>
    %c0_19 = arith.constant 0 : index
    %c0_20 = arith.constant 0 : index
    %c0_21 = arith.constant 0 : index
    %c0_22 = arith.constant 0 : index
    %42 = vector.load %arg6[%c0_19, %c0_20, %c0_21, %c0_22] : memref<1x1x1x1xf32, #tpu.memory_space<vmem>>, vector<1x1x1x1xf32>
    tpu.vector_store %arg6[%c0_19, %c0_20, %c0_21, %c0_22], %41 {strides = array<i32>} : memref<1x1x1x1xf32, #tpu.memory_space<vmem>>, vector<1x1x1x1xf32>,
    %43 = arith.mulf %13, %19 : vector<1x1x1280xf32>
    %44 = vector.shape_cast %43 : vector<1x1x1280xf32> to vector<1x1x1x1280xf32>
    %cst_23 = arith.constant dense<0.000000e+00> : vector<1xf32>
    %45 = vector.multi_reduction <add>, %44, %cst_23 [1, 2, 3] : vector<1x1x1x1280xf32> to vector<1xf32>
    %46 = vector.shape_cast %45 : vector<1xf32> to vector<1x1x1x1xf32>
    %47 = vector.extract %46[0, 0, 0, 0] : f32 from vector<1x1x1x1xf32>
    %48 = vector.broadcast %47 : f32 to vector<1x1x1x1xf32>
    %c0_24 = arith.constant 0 : index
    %c0_25 = arith.constant 0 : index
    %c0_26 = arith.constant 0 : index
    %c0_27 = arith.constant 0 : index
    %49 = vector.load %arg7[%c0_24, %c0_25, %c0_26, %c0_27] : memref<1x1x1x1xf32, #tpu.memory_space<vmem>>, vector<1x1x1x1xf32>
    tpu.vector_store %arg7[%c0_24, %c0_25, %c0_26, %c0_27], %48 {strides = array<i32>} : memref<1x1x1x1xf32, #tpu.memory_space<vmem>>, vector<1x1x1x1xf32>,
    return
  }
  func.func @transform_0(%arg0: i32, %arg1: i32) -> (i32, i32, i32) {
    %c0_i32 = arith.constant 0 : i32
    %c0_i32_0 = arith.constant 0 : i32
    return %arg0, %c0_i32, %arg1 : i32, i32, i32
  }
  func.func @transform_1(%arg0: i32, %arg1: i32) -> (i32, i32, i32) {
    %c0_i32 = arith.constant 0 : i32
    %c0_i32_0 = arith.constant 0 : i32
    return %arg0, %c0_i32, %arg1 : i32, i32, i32
  }
  func.func @transform_2(%arg0: i32, %arg1: i32) -> (i32, i32, i32) {
    %c0_i32 = arith.constant 0 : i32
    %c0_i32_0 = arith.constant 0 : i32
    return %arg0, %c0_i32, %arg1 : i32, i32, i32
  }
  func.func @transform_3(%arg0: i32, %arg1: i32) -> (i32, i32, i32) {
    %c0_i32 = arith.constant 0 : i32
    %c0_i32_0 = arith.constant 0 : i32
    return %arg0, %c0_i32, %arg1 : i32, i32, i32
  }
  func.func @transform_4(%arg0: i32, %arg1: i32) -> (i32, i32, i32, i32) {
    %c0_i32 = arith.constant 0 : i32
    %c0_i32_0 = arith.constant 0 : i32
    %c0_i32_1 = arith.constant 0 : i32
    return %arg0, %arg1, %c0_i32, %c0_i32_0 : i32, i32, i32, i32
  }
  func.func @transform_5(%arg0: i32, %arg1: i32) -> (i32, i32, i32, i32) {
    %c0_i32 = arith.constant 0 : i32
    %c0_i32_0 = arith.constant 0 : i32
    %c0_i32_1 = arith.constant 0 : i32
    return %arg0, %arg1, %c0_i32, %c0_i32_0 : i32, i32, i32, i32
  }
}

</mosaic_0001>

<llo_original>
// kernel: confidence_loss.1
$region0: #{confidence_loss.1}
  #allocation0 [shape = 'u32[]', space=smem, size = 0x4, offset = 0x4, fixed_abs, tag = 'smem constant byte address 0x4 - core index']
  #allocation1 [shape = 'u32[144,128]{1,0:T(1,128)}', space=vmem, size = 0x12000, scoped, tag = 'internal scratch']
  %s0 = inlined_call_operand.vmem [shape: f32[2,8,1280], index: 0, kind: input, shape index: {}]
  %s1 = inlined_call_operand.vmem [shape: s32[2,1,1280], index: 1, kind: input, shape index: {}]
  %s2 = inlined_call_operand.vmem [shape: f32[2,1,1280], index: 2, kind: output, shape index: {0}]
  %s3 = inlined_call_operand.vmem [shape: f32[2,1,1280], index: 3, kind: output, shape index: {1}]
  %s4 = inlined_call_operand.vmem [shape: f32[2,1,1,1], index: 4, kind: output, shape index: {2}]
  %s5 = inlined_call_operand.vmem [shape: f32[2,1,1,1], index: 5, kind: output, shape index: {3}]
  %6 = xla_tuple %s2, %s3, %s4, %s5
  %s7 = sld [smem:[#allocation0]]
  $region65: #{confidence_loss.1} parent=0
    _
  %s9 = ssub.s32 1, %s7
  %s10 = scalar_select 0, %s9, %s7
  loop: start=0, step=1, limit=4
  $region2: #{confidence_loss.1} parent=0 // loop_pre_header
    _
  $region3: #{confidence_loss.1} parent=0 // loop_header
    %s12 = sphi 0, %s16
    %p13 = scmp.ge.s32.totalorder %s12, 4
    %s19 = sphi 0, %s31
    %s20 = sphi 0, %s27
    %s21 = sphi 0, %s19
    %s22 = sphi 0, %s20
    %s23 = sphi 0, %s21
    %s24 = sphi 0, %s22
    %s36 = sphi 0, %s38
    %s39 = sphi 0, %s36
    %s40 = sphi 0, %s39
    %s56 = sphi 0, %s40
    %s64 = sphi 0, %s66
    %s67 = sphi 0, %s64
    %s68 = sphi 0, %s67
    %s84 = sphi 0, %s68
    %s92 = sphi 0, %s94
    %s95 = sphi 0, %s92
    %s96 = sphi 0, %s95
    %s112 = sphi 0, %s96
    %s120 = sphi 0, %s122
    %s123 = sphi 0, %s120
    %s124 = sphi 0, %s123
    %s140 = sphi 0, %s124
    %s148 = sphi 0, %s150
    %s151 = sphi 0, %s148
    %s152 = sphi 0, %s151
    %s168 = sphi 0, %s152
    %s176 = sphi 0, %s178
    %s179 = sphi 0, %s176
    %s180 = sphi 0, %s179
    %s196 = sphi 0, %s180
  $region4: #{confidence_loss.1} parent=0 // loop_header_branch
    %15 = sbr.rel (%p13) target = $region8
  $region5: #{confidence_loss.1} parent=0 // loop_body
    %s17 = ssub.s32 %s12, 1
    %s18 = ssub.s32 %s12, 2
    %s25 = sadd.s32 1, %s20
    %p26 = scmp.ge.s32.totalorder %s25, 1
    %s27 = scalar_select %p26, 0, %s25
    %s28 = sadd.s32 1, %s19
    %s29 = scalar_select %p26, %s28, %s19
    %p30 = scmp.ge.s32.totalorder %s29, 2
    %s31 = scalar_select %p30, 0, %s29
    %s32 = ssub.s32 %s19, %s31
    %s33 = ssub.s32 %s20, %s27
    %s34 = sor.u32 %s32, %s33
    %p35 = scmp.eq.s32.totalorder %s34, 0
    %s37 = sadd.s32 %s36, 1
    %s38 = scalar_select %p35, %s36, %s37
    %p41 = pneg %p35
    %p42 = scmp.eq.s32.totalorder %s12, 1
    %p43 = por %p41, %p42
    %p44 = scmp.ne.s32.totalorder %s36, %s39
    %p45 = scmp.eq.s32.totalorder %s12, 0
    %p46 = por %p44, %p45
    %p47 = scmp.ne.s32.totalorder %s36, %s39
    %p48 = scmp.eq.s32.totalorder %s17, 1
    %p49 = por %p47, %p48
    %p50 = scmp.ne.s32.totalorder %s39, %s40
    %p51 = scmp.eq.s32.totalorder %s17, 0
    %p52 = por %p50, %p51
    %p53 = scmp.ne.s32.totalorder %s39, %s40
    %p54 = scmp.eq.s32.totalorder %s18, 1
    %p55 = por %p53, %p54
    %p57 = scmp.ne.s32.totalorder %s40, %s56
    %p58 = scmp.eq.s32.totalorder %s18, 0
    %p59 = por %p57, %p58
    %s60 = ssub.s32 %s19, %s31
    %s61 = ssub.s32 %s20, %s27
    %s62 = sor.u32 %s60, %s61
    %p63 = scmp.eq.s32.totalorder %s62, 0
    %s65 = sadd.s32 %s64, 1
    %s66 = scalar_select %p63, %s64, %s65
    %p69 = pneg %p63
    %p70 = scmp.eq.s32.totalorder %s12, 1
    %p71 = por %p69, %p70
    %p72 = scmp.ne.s32.totalorder %s64, %s67
    %p73 = scmp.eq.s32.totalorder %s12, 0
    %p74 = por %p72, %p73
    %p75 = scmp.ne.s32.totalorder %s64, %s67
    %p76 = scmp.eq.s32.totalorder %s17, 1
    %p77 = por %p75, %p76
    %p78 = scmp.ne.s32.totalorder %s67, %s68
    %p79 = scmp.eq.s32.totalorder %s17, 0
    %p80 = por %p78, %p79
    %p81 = scmp.ne.s32.totalorder %s67, %s68
    %p82 = scmp.eq.s32.totalorder %s18, 1
    %p83 = por %p81, %p82
    %p85 = scmp.ne.s32.totalorder %s68, %s84
    %p86 = scmp.eq.s32.totalorder %s18, 0
    %p87 = por %p85, %p86
    %s88 = ssub.s32 %s19, %s31
    %s89 = ssub.s32 %s20, %s27
    %s90 = sor.u32 %s88, %s89
    %p91 = scmp.eq.s32.totalorder %s90, 0
    %s93 = sadd.s32 %s92, 1
    %s94 = scalar_select %p91, %s92, %s93
    %p97 = pneg %p91
    %p98 = scmp.eq.s32.totalorder %s12, 1
    %p99 = por %p97, %p98
    %p100 = scmp.ne.s32.totalorder %s92, %s95
    %p101 = scmp.eq.s32.totalorder %s12, 0
    %p102 = por %p100, %p101
    %p103 = scmp.ne.s32.totalorder %s92, %s95
    %p104 = scmp.eq.s32.totalorder %s17, 1
    %p105 = por %p103, %p104
    %p106 = scmp.ne.s32.totalorder %s95, %s96
    %p107 = scmp.eq.s32.totalorder %s17, 0
    %p108 = por %p106, %p107
    %p109 = scmp.ne.s32.totalorder %s95, %s96
    %p110 = scmp.eq.s32.totalorder %s18, 1
    %p111 = por %p109, %p110
    %p113 = scmp.ne.s32.totalorder %s96, %s112
    %p114 = scmp.eq.s32.totalorder %s18, 0
    %p115 = por %p113, %p114
    %s116 = ssub.s32 %s19, %s31
    %s117 = ssub.s32 %s20, %s27
    %s118 = sor.u32 %s116, %s117
    %p119 = scmp.eq.s32.totalorder %s118, 0
    %s121 = sadd.s32 %s120, 1
    %s122 = scalar_select %p119, %s120, %s121
    %p125 = pneg %p119
    %p126 = scmp.eq.s32.totalorder %s12, 1
    %p127 = por %p125, %p126
    %p128 = scmp.ne.s32.totalorder %s120, %s123
    %p129 = scmp.eq.s32.totalorder %s12, 0
    %p130 = por %p128, %p129
    %p131 = scmp.ne.s32.totalorder %s120, %s123
    %p132 = scmp.eq.s32.totalorder %s17, 1
    %p133 = por %p131, %p132
    %p134 = scmp.ne.s32.totalorder %s123, %s124
    %p135 = scmp.eq.s32.totalorder %s17, 0
    %p136 = por %p134, %p135
    %p137 = scmp.ne.s32.totalorder %s123, %s124
    %p138 = scmp.eq.s32.totalorder %s18, 1
    %p139 = por %p137, %p138
    %p141 = scmp.ne.s32.totalorder %s124, %s140
    %p142 = scmp.eq.s32.totalorder %s18, 0
    %p143 = por %p141, %p142
    %s144 = ssub.s32 %s19, %s31
    %s145 = ssub.s32 %s20, %s27
    %s146 = sor.u32 %s144, %s145
    %p147 = scmp.eq.s32.totalorder %s146, 0
    %s149 = sadd.s32 %s148, 1
    %s150 = scalar_select %p147, %s148, %s149
    %p153 = pneg %p147
    %p154 = scmp.eq.s32.totalorder %s12, 1
    %p155 = por %p153, %p154
    %p156 = scmp.ne.s32.totalorder %s148, %s151
    %p157 = scmp.eq.s32.totalorder %s12, 0
    %p158 = por %p156, %p157
    %p159 = scmp.ne.s32.totalorder %s148, %s151
    %p160 = scmp.eq.s32.totalorder %s17, 1
    %p161 = por %p159, %p160
    %p162 = scmp.ne.s32.totalorder %s151, %s152
    %p163 = scmp.eq.s32.totalorder %s17, 0
    %p164 = por %p162, %p163
    %p165 = scmp.ne.s32.totalorder %s151, %s152
    %p166 = scmp.eq.s32.totalorder %s18, 1
    %p167 = por %p165, %p166
    %p169 = scmp.ne.s32.totalorder %s152, %s168
    %p170 = scmp.eq.s32.totalorder %s18, 0
    %p171 = por %p169, %p170
    %s172 = ssub.s32 %s19, %s31
    %s173 = ssub.s32 %s20, %s27
    %s174 = sor.u32 %s172, %s173
    %p175 = scmp.eq.s32.totalorder %s174, 0
    %s177 = sadd.s32 %s176, 1
    %s178 = scalar_select %p175, %s176, %s177
    %p181 = pneg %p175
    %p182 = scmp.eq.s32.totalorder %s12, 1
    %p183 = por %p181, %p182
    %p184 = scmp.ne.s32.totalorder %s176, %s179
    %p185 = scmp.eq.s32.totalorder %s12, 0
    %p186 = por %p184, %p185
    %p187 = scmp.ne.s32.totalorder %s176, %s179
    %p188 = scmp.eq.s32.totalorder %s17, 1
    %p189 = por %p187, %p188
    %p190 = scmp.ne.s32.totalorder %s179, %s180
    %p191 = scmp.eq.s32.totalorder %s17, 0
    %p192 = por %p190, %p191
    %p193 = scmp.ne.s32.totalorder %s179, %s180
    %p194 = scmp.eq.s32.totalorder %s18, 1
    %p195 = por %p193, %p194
    %p197 = scmp.ne.s32.totalorder %s180, %s196
    %p198 = scmp.eq.s32.totalorder %s18, 0
    %p199 = por %p197, %p198
    %p200 = scmp.le.s32.totalorder 1, %s12
    %p201 = scmp.lt.s32.totalorder %s12, 3
    %p202 = pnand %p200, %p201
    %p203 = pneg %p202
    // Predicated region
    $region9: #{confidence_loss.1} parent=5 // pred_check
      _
    $region10: #{confidence_loss.1} parent=5 // pred_check_branch
      %205 = sbr.rel (%p202) target = $region12
    $region11: #{confidence_loss.1} parent=5 // pred_region
      %s206 = ssub.s32 %s12, 1
    $region12: #{confidence_loss.1} parent=5 // pred_fallthru
      _
    %p207 = scmp.lt.s32.totalorder %s12, 2
    // Predicated region
    $region13: #{confidence_loss.1} parent=5 // pred_check
      %p208 = pneg %p207
    $region14: #{confidence_loss.1} parent=5 // pred_check_branch
      %210 = sbr.rel (%p208) target = $region16
    $region15: #{confidence_loss.1} parent=5 // pred_region
      // Predicated region
      $region17: #{confidence_loss.1} parent=15 // pred_check
        %p211 = pneg %p46
      $region18: #{confidence_loss.1} parent=15 // pred_check_branch
        %213 = sbr.rel (%p211) target = $region20
      $region19: #{confidence_loss.1} parent=15 // pred_region
        %s214 = smul.u32 10, %s20
        %p215 = scmp.lt.s32.totalorder %s19, 1
        %s216 = scalar_select %p215, %s19, 1
        %p217 = scmp.lt.s32.totalorder %s214, 9
        %s218 = scalar_select %p217, %s214, 9
        %s219 = smul.addr %s216, 10
        %s220 = sadd.s32 %s218, %s219
        %s221 = smul.addr %s220, 8
        %s222 = scalar_lea.vmem %s0, %s221
        %s223 = smul.u32 10, %s20
      $region20: #{confidence_loss.1} parent=15 // pred_fallthru
        _
      // Predicated region
      $region21: #{confidence_loss.1} parent=15 // pred_check
        %p224 = pneg %p74
      $region22: #{confidence_loss.1} parent=15 // pred_check_branch
        %226 = sbr.rel (%p224) target = $region24
      $region23: #{confidence_loss.1} parent=15 // pred_region
        %s227 = smul.u32 10, %s20
        %p228 = scmp.lt.s32.totalorder %s19, 1
        %s229 = scalar_select %p228, %s19, 1
        %p230 = scmp.lt.s32.totalorder %s227, 9
        %s231 = scalar_select %p230, %s227, 9
        %s232 = smul.addr %s229, 10
        %s233 = sadd.s32 %s231, %s232
        %s234 = scalar_lea.vmem %s1, %s233
        %s235 = smul.u32 10, %s20
      $region24: #{confidence_loss.1} parent=15 // pred_fallthru
        _
    $region16: #{confidence_loss.1} parent=5 // pred_fallthru
      _
    %p236 = scmp.le.s32.totalorder 1, %s12
    %p237 = scmp.lt.s32.totalorder %s12, 3
    %p238 = pnand %p236, %p237
    %p239 = pneg %p238
    // Predicated region
    $region25: #{confidence_loss.1} parent=5 // pred_check
      _
    $region26: #{confidence_loss.1} parent=5 // pred_check_branch
      %241 = sbr.rel (%p238) target = $region28
    $region27: #{confidence_loss.1} parent=5 // pred_region
      %s242 = ssub.s32 %s12, 1
      %s243 = smul.u32 10, %s22
      %p244 = scmp.lt.s32.totalorder %s21, 1
      %s245 = scalar_select %p244, %s21, 1
      %p246 = scmp.lt.s32.totalorder %s243, 9
      %s247 = scalar_select %p246, %s243, 9
      %s248 = smul.addr %s245, 10
      %s249 = sadd.s32 %s247, %s248
      %s250 = smul.addr %s249, 8
      %s251 = scalar_lea.vmem %s0, %s250
      %p252 = pneg %p52
      %p253 = pneg %p49
      %s254 = smul.u32 10, %s22
      %p255 = scmp.lt.s32.totalorder %s21, 1
      %s256 = scalar_select %p255, %s21, 1
      %p257 = scmp.lt.s32.totalorder %s254, 9
      %s258 = scalar_select %p257, %s254, 9
      %s259 = smul.addr %s256, 10
      %s260 = sadd.s32 %s258, %s259
      %s261 = scalar_lea.vmem %s1, %s260
      %p262 = pneg %p80
      %p263 = pneg %p77
      %p264 = pneg %p108
      %p265 = pneg %p105
      %s266 = smul.u32 10, %s22
      %p267 = scmp.lt.s32.totalorder %s21, 1
      %s268 = scalar_select %p267, %s21, 1
      %p269 = scmp.lt.s32.totalorder %s266, 9
      %s270 = scalar_select %p269, %s266, 9
      %s271 = smul.addr %s268, 10
      %s272 = sadd.s32 %s270, %s271
      %s273 = scalar_lea.vmem %s2, %s272
      %p274 = pneg %p136
      %p275 = pneg %p133
      %s276 = smul.u32 10, %s22
      %p277 = scmp.lt.s32.totalorder %s21, 1
      %s278 = scalar_select %p277, %s21, 1
      %p279 = scmp.lt.s32.totalorder %s276, 9
      %s280 = scalar_select %p279, %s276, 9
      %s281 = smul.addr %s278, 10
      %s282 = sadd.s32 %s280, %s281
      %s283 = scalar_lea.vmem %s3, %s282
      %p284 = pneg %p164
      %p285 = pneg %p161
      %p286 = scmp.lt.s32.totalorder %s21, 1
      %s287 = scalar_select %p286, %s21, 1
      %p288 = scmp.lt.s32.totalorder %s22, 0
      %s289 = scalar_select %p288, %s22, 0
      %s290 = sadd.s32 %s289, %s287
      %s291 = scalar_lea.vmem %s4, %s290
      %p292 = pneg %p192
      %p293 = pneg %p189
      %p294 = scmp.lt.s32.totalorder %s21, 1
      %s295 = scalar_select %p294, %s21, 1
      %p296 = scmp.lt.s32.totalorder %s22, 0
      %s297 = scalar_select %p296, %s22, 0
      %s298 = sadd.s32 %s297, %s295
      %s299 = scalar_lea.vmem %s5, %s298
      %s300 = smul.u32 10, %s22
      %p301 = scmp.lt.s32.totalorder %s21, 1
      %s302 = scalar_select %p301, %s21, 1
      %p303 = scmp.lt.s32.totalorder %s300, 9
      %s304 = scalar_select %p303, %s300, 9
      %s305 = smul.addr %s302, 10
      %s306 = sadd.s32 %s304, %s305
      %s307 = smul.addr %s306, 8
      %s308 = scalar_lea.vmem %s0, %s307
      %s309 = smul.u32 10, %s22
      %s310 = smul.u32 10, %s22
      %p311 = scmp.lt.s32.totalorder %s21, 1
      %s312 = scalar_select %p311, %s21, 1
      %p313 = scmp.lt.s32.totalorder %s310, 9
      %s314 = scalar_select %p313, %s310, 9
      %s315 = smul.addr %s312, 10
      %s316 = sadd.s32 %s314, %s315
      %s317 = scalar_lea.vmem %s1, %s316
      %s318 = smul.u32 10, %s22
      %s319 = smul.u32 10, %s22
      %p320 = scmp.lt.s32.totalorder %s21, 1
      %s321 = scalar_select %p320, %s21, 1
      %p322 = scmp.lt.s32.totalorder %s319, 9
      %s323 = scalar_select %p322, %s319, 9
      %s324 = smul.addr %s321, 10
      %s325 = sadd.s32 %s323, %s324
      %s326 = scalar_lea.vmem %s2, %s325
      %s327 = smul.u32 10, %s22
      %s328 = smul.u32 10, %s22
      %p329 = scmp.lt.s32.totalorder %s21, 1
      %s330 = scalar_select %p329, %s21, 1
      %p331 = scmp.lt.s32.totalorder %s328, 9
      %s332 = scalar_select %p331, %s328, 9
      %s333 = smul.addr %s330, 10
      %s334 = sadd.s32 %s332, %s333
      %s335 = scalar_lea.vmem %s3, %s334
      %s336 = smul.u32 10, %s22
      %p337 = scmp.lt.s32.totalorder %s21, 1
      %s338 = scalar_select %p337, %s21, 1
      %p339 = scmp.lt.s32.totalorder %s22, 0
      %s340 = scalar_select %p339, %s22, 0
      %s341 = sadd.s32 %s340, %s338
      %s342 = scalar_lea.vmem %s4, %s341
      %p343 = scmp.lt.s32.totalorder %s21, 1
      %s344 = scalar_select %p343, %s21, 1
      %p345 = scmp.lt.s32.totalorder %s22, 0
      %s346 = scalar_select %p345, %s22, 0
      %s347 = sadd.s32 %s346, %s344
      %s348 = scalar_lea.vmem %s5, %s347
      %v349 = vld [vmem:[%s308] sm:$0xff]
      %v350 = vld [vmem:[%s308 + $0x8] sm:$0xff]
      %v351 = vld [vmem:[%s308 + $0x10] sm:$0xff]
      %v352 = vld [vmem:[%s308 + $0x18] sm:$0xff]
      %v353 = vld [vmem:[%s308 + $0x20] sm:$0xff]
      %v354 = vld [vmem:[%s308 + $0x28] sm:$0xff]
      %v355 = vld [vmem:[%s308 + $0x30] sm:$0xff]
      %v356 = vld [vmem:[%s308 + $0x38] sm:$0xff]
      %v357 = vld [vmem:[%s308 + $0x40] sm:$0xff]
      %v358 = vld [vmem:[%s308 + $0x48] sm:$0xff]
      %v359 = vld [vmem:[%s317] sm:$0xff]
      %v360 = vld [vmem:[%s317 + $0x8] sm:$0x3]
      %v361 = vlaneseq
      %v362 = vshrl.u32 %v361, 7
      %v363 = vlaneseq
      %v364 = vshrl.u32 %v363, 7
      %v365 = vsub.s32 0, %v364
      %v366 = vrot.slane %v359, %v365
      %v367 = vlaneseq
      %v368 = vshrl.u32 %v367, 7
      %v369 = vsub.s32 1, %v368
      %v370 = vrot.slane %v359, %v369
      %v371 = vlaneseq
      %v372 = vshrl.u32 %v371, 7
      %v373 = vsub.s32 2, %v372
      %v374 = vrot.slane %v359, %v373
      %v375 = vlaneseq
      %v376 = vshrl.u32 %v375, 7
      %v377 = vsub.s32 3, %v376
      %v378 = vrot.slane %v359, %v377
      %v379 = vlaneseq
      %v380 = vshrl.u32 %v379, 7
      %v381 = vsub.s32 4, %v380
      %v382 = vrot.slane %v359, %v381
      %v383 = vlaneseq
      %v384 = vshrl.u32 %v383, 7
      %v385 = vsub.s32 5, %v384
      %v386 = vrot.slane %v359, %v385
      %v387 = vlaneseq
      %v388 = vshrl.u32 %v387, 7
      %v389 = vsub.s32 6, %v388
      %v390 = vrot.slane %v359, %v389
      %v391 = vlaneseq
      %v392 = vshrl.u32 %v391, 7
      %v393 = vsub.s32 7, %v392
      %v394 = vrot.slane %v359, %v393
      %v395 = vlaneseq
      %v396 = vshrl.u32 %v395, 7
      %v397 = vsub.s32 0, %v396
      %v398 = vrot.slane %v360, %v397
      %v399 = vlaneseq
      %v400 = vshrl.u32 %v399, 7
      %v401 = vsub.s32 1, %v400
      %v402 = vrot.slane %v360, %v401
      %vm403 = vcmp.eq.s32.totalorder %v362, %v366
      %vm404 = vcmp.eq.s32.totalorder %v362, %v370
      %vm405 = vcmp.eq.s32.totalorder %v362, %v374
      %vm406 = vcmp.eq.s32.totalorder %v362, %v378
      %vm407 = vcmp.eq.s32.totalorder %v362, %v382
      %vm408 = vcmp.eq.s32.totalorder %v362, %v386
      %vm409 = vcmp.eq.s32.totalorder %v362, %v390
      %vm410 = vcmp.eq.s32.totalorder %v362, %v394
      %vm411 = vcmp.eq.s32.totalorder %v362, %v398
      %vm412 = vcmp.eq.s32.totalorder %v362, %v402
      %v413 = vsel %vm403, %v349, 0.0
      %v414 = vsel %vm404, %v350, 0.0
      %v415 = vsel %vm405, %v351, 0.0
      %v416 = vsel %vm406, %v352, 0.0
      %v417 = vsel %vm407, %v353, 0.0
      %v418 = vsel %vm408, %v354, 0.0
      %v419 = vsel %vm409, %v355, 0.0
      %v420 = vsel %vm410, %v356, 0.0
      %v421 = vsel %vm411, %v357, 0.0
      %v422 = vsel %vm412, %v358, 0.0
      %v423 = vrot.slane %v413, 4
      %v424 = vadd.f32 %v413, %v423
      %v425 = vrot.slane %v424, 2
      %v426 = vadd.f32 %v424, %v425
      %v427 = vrot.slane %v426, 1
      %v428 = vadd.f32 %v426, %v427
      %v429 = vrot.slane %v414, 4
      %v430 = vadd.f32 %v414, %v429
      %v431 = vrot.slane %v430, 2
      %v432 = vadd.f32 %v430, %v431
      %v433 = vrot.slane %v432, 1
      %v434 = vadd.f32 %v432, %v433
      %v435 = vrot.slane %v415, 4
      %v436 = vadd.f32 %v415, %v435
      %v437 = vrot.slane %v436, 2
      %v438 = vadd.f32 %v436, %v437
      %v439 = vrot.slane %v438, 1
      %v440 = vadd.f32 %v438, %v439
      %v441 = vrot.slane %v416, 4
      %v442 = vadd.f32 %v416, %v441
      %v443 = vrot.slane %v442, 2
      %v444 = vadd.f32 %v442, %v443
      %v445 = vrot.slane %v444, 1
      %v446 = vadd.f32 %v444, %v445
      %v447 = vrot.slane %v417, 4
      %v448 = vadd.f32 %v417, %v447
      %v449 = vrot.slane %v448, 2
      %v450 = vadd.f32 %v448, %v449
      %v451 = vrot.slane %v450, 1
      %v452 = vadd.f32 %v450, %v451
      %v453 = vrot.slane %v418, 4
      %v454 = vadd.f32 %v418, %v453
      %v455 = vrot.slane %v454, 2
      %v456 = vadd.f32 %v454, %v455
      %v457 = vrot.slane %v456, 1
      %v458 = vadd.f32 %v456, %v457
      %v459 = vrot.slane %v419, 4
      %v460 = vadd.f32 %v419, %v459
      %v461 = vrot.slane %v460, 2
      %v462 = vadd.f32 %v460, %v461
      %v463 = vrot.slane %v462, 1
      %v464 = vadd.f32 %v462, %v463
      %v465 = vrot.slane %v420, 4
      %v466 = vadd.f32 %v420, %v465
      %v467 = vrot.slane %v466, 2
      %v468 = vadd.f32 %v466, %v467
      %v469 = vrot.slane %v468, 1
      %v470 = vadd.f32 %v468, %v469
      %v471 = vrot.slane %v421, 4
      %v472 = vadd.f32 %v421, %v471
      %v473 = vrot.slane %v472, 2
      %v474 = vadd.f32 %v472, %v473
      %v475 = vrot.slane %v474, 1
      %v476 = vadd.f32 %v474, %v475
      %v477 = vrot.slane %v422, 4
      %v478 = vadd.f32 %v422, %v477
      %v479 = vrot.slane %v478, 2
      %v480 = vadd.f32 %v478, %v479
      %v481 = vrot.slane %v480, 1
      %v482 = vadd.f32 %v480, %v481
      %v483 = vmax.f32 %v428, 1e-07
      %v484 = vmax.f32 %v434, 1e-07
      %v485 = vmax.f32 %v440, 1e-07
      %v486 = vmax.f32 %v446, 1e-07
      %v487 = vmax.f32 %v452, 1e-07
      %v488 = vmax.f32 %v458, 1e-07
      %v489 = vmax.f32 %v464, 1e-07
      %v490 = vmax.f32 %v470, 1e-07
      %v491 = vmax.f32 %v476, 1e-07
      %v492 = vmax.f32 %v482, 1e-07
      %v493 = vlog2.pop %v483
      %v494 = vmul.f32 %v493, 0.6931472
      %v495 = vlog2.pop %v484
      %v496 = vmul.f32 %v495, 0.6931472
      %v497 = vlog2.pop %v485
      %v498 = vmul.f32 %v497, 0.6931472
      %v499 = vlog2.pop %v486
      %v500 = vmul.f32 %v499, 0.6931472
      %v501 = vlog2.pop %v487
      %v502 = vmul.f32 %v501, 0.6931472
      %v503 = vlog2.pop %v488
      %v504 = vmul.f32 %v503, 0.6931472
      %v505 = vlog2.pop %v489
      %v506 = vmul.f32 %v505, 0.6931472
      %v507 = vlog2.pop %v490
      %v508 = vmul.f32 %v507, 0.6931472
      %v509 = vlog2.pop %v491
      %v510 = vmul.f32 %v509, 0.6931472
      %v511 = vlog2.pop %v492
      %v512 = vmul.f32 %v511, 0.6931472
      %v513 = vsub.f32 0.0, %v494
      %v514 = vsub.f32 0.0, %v496
      %v515 = vsub.f32 0.0, %v498
      %v516 = vsub.f32 0.0, %v500
      %v517 = vsub.f32 0.0, %v502
      %v518 = vsub.f32 0.0, %v504
      %v519 = vsub.f32 0.0, %v506
      %v520 = vsub.f32 0.0, %v508
      %v521 = vsub.f32 0.0, %v510
      %v522 = vsub.f32 0.0, %v512
      %vm523 = vcmp.eq.s32.totalorder %v359, 0
      %vm524 = vcmp.eq.s32.totalorder %v360, 0
      %v525 = vsel %vm523, 1, 0
      %v526 = vsel %vm524, 1, 0
      %v527 = vcvt.s32.f32 %v525
      %v528 = vcvt.s32.f32 %v526
      %v529 = vsub.f32 1.0, %v527
      %v530 = vsub.f32 1.0, %v528
      %v531 = vrot.slane %v349, 4
      %v532 = vadd.f32 %v349, %v531
      %v533 = vrot.slane %v532, 2
      %v534 = vadd.f32 %v532, %v533
      %v535 = vrot.slane %v534, 1
      %v536 = vadd.f32 %v534, %v535
      %v537 = vrot.slane %v350, 4
      %v538 = vadd.f32 %v350, %v537
      %v539 = vrot.slane %v538, 2
      %v540 = vadd.f32 %v538, %v539
      %v541 = vrot.slane %v540, 1
      %v542 = vadd.f32 %v540, %v541
      %v543 = vrot.slane %v351, 4
      %v544 = vadd.f32 %v351, %v543
      %v545 = vrot.slane %v544, 2
      %v546 = vadd.f32 %v544, %v545
      %v547 = vrot.slane %v546, 1
      %v548 = vadd.f32 %v546, %v547
      %v549 = vrot.slane %v352, 4
      %v550 = vadd.f32 %v352, %v549
      %v551 = vrot.slane %v550, 2
      %v552 = vadd.f32 %v550, %v551
      %v553 = vrot.slane %v552, 1
      %v554 = vadd.f32 %v552, %v553
      %v555 = vrot.slane %v353, 4
      %v556 = vadd.f32 %v353, %v555
      %v557 = vrot.slane %v556, 2
      %v558 = vadd.f32 %v556, %v557
      %v559 = vrot.slane %v558, 1
      %v560 = vadd.f32 %v558, %v559
      %v561 = vrot.slane %v354, 4
      %v562 = vadd.f32 %v354, %v561
      %v563 = vrot.slane %v562, 2
      %v564 = vadd.f32 %v562, %v563
      %v565 = vrot.slane %v564, 1
      %v566 = vadd.f32 %v564, %v565
      %v567 = vrot.slane %v355, 4
      %v568 = vadd.f32 %v355, %v567
      %v569 = vrot.slane %v568, 2
      %v570 = vadd.f32 %v568, %v569
      %v571 = vrot.slane %v570, 1
      %v572 = vadd.f32 %v570, %v571
      %v573 = vrot.slane %v356, 4
      %v574 = vadd.f32 %v356, %v573
      %v575 = vrot.slane %v574, 2
      %v576 = vadd.f32 %v574, %v575
      %v577 = vrot.slane %v576, 1
      %v578 = vadd.f32 %v576, %v577
      %v579 = vrot.slane %v357, 4
      %v580 = vadd.f32 %v357, %v579
      %v581 = vrot.slane %v580, 2
      %v582 = vadd.f32 %v580, %v581
      %v583 = vrot.slane %v582, 1
      %v584 = vadd.f32 %v582, %v583
      %v585 = vrot.slane %v358, 4
      %v586 = vadd.f32 %v358, %v585
      %v587 = vrot.slane %v586, 2
      %v588 = vadd.f32 %v586, %v587
      %v589 = vrot.slane %v588, 1
      %v590 = vadd.f32 %v588, %v589
      %v591 = vsub.f32 %v536, %v349
      %v592 = vsub.f32 %v542, %v350
      %v593 = vsub.f32 %v548, %v351
      %v594 = vsub.f32 %v554, %v352
      %v595 = vsub.f32 %v560, %v353
      %v596 = vsub.f32 %v566, %v354
      %v597 = vsub.f32 %v572, %v355
      %v598 = vsub.f32 %v578, %v356
      %v599 = vsub.f32 %v584, %v357
      %v600 = vsub.f32 %v590, %v358
      %v603 = vlaneseq
      %v604 = vshrl.u32 %v603, 7
      %v605 = vsub.s32 0, %v604
      %v606 = vrot.slane %v527, %v605
      %v607 = vlaneseq
      %v608 = vshrl.u32 %v607, 7
      %v609 = vsub.s32 1, %v608
      %v610 = vrot.slane %v527, %v609
      %v611 = vlaneseq
      %v612 = vshrl.u32 %v611, 7
      %v613 = vsub.s32 2, %v612
      %v614 = vrot.slane %v527, %v613
      %v615 = vlaneseq
      %v616 = vshrl.u32 %v615, 7
      %v617 = vsub.s32 3, %v616
      %v618 = vrot.slane %v527, %v617
      %v619 = vlaneseq
      %v620 = vshrl.u32 %v619, 7
      %v621 = vsub.s32 4, %v620
      %v622 = vrot.slane %v527, %v621
      %v623 = vlaneseq
      %v624 = vshrl.u32 %v623, 7
      %v625 = vsub.s32 5, %v624
      %v626 = vrot.slane %v527, %v625
      %v627 = vlaneseq
      %v628 = vshrl.u32 %v627, 7
      %v629 = vsub.s32 6, %v628
      %v630 = vrot.slane %v527, %v629
      %v631 = vlaneseq
      %v632 = vshrl.u32 %v631, 7
      %v633 = vsub.s32 7, %v632
      %v634 = vrot.slane %v527, %v633
      %v635 = vlaneseq
      %v636 = vshrl.u32 %v635, 7
      %v637 = vsub.s32 0, %v636
      %v638 = vrot.slane %v528, %v637
      %v639 = vlaneseq
      %v640 = vshrl.u32 %v639, 7
      %v641 = vsub.s32 1, %v640
      %v642 = vrot.slane %v528, %v641
      %v653 = vmul.f32 %v591, %v606
      %v654 = vmul.f32 %v592, %v610
      %v655 = vmul.f32 %v593, %v614
      %v656 = vmul.f32 %v594, %v618
      %v657 = vmul.f32 %v595, %v622
      %v658 = vmul.f32 %v596, %v626
      %v659 = vmul.f32 %v597, %v630
      %v660 = vmul.f32 %v598, %v634
      %v661 = vmul.f32 %v599, %v638
      %v662 = vmul.f32 %v600, %v642
      %v663 = vlaneseq
      %v664 = vand.u32 %v663, 127
      %v665 = vadd.s32 %v664, 128
      %v666 = vadd.s32 %v664, 256
      %v667 = vadd.s32 %v664, 384
      %v668 = vadd.s32 %v664, 512
      %v669 = vadd.s32 %v664, 640
      %v670 = vadd.s32 %v664, 768
      %v671 = vadd.s32 %v664, 896
      %v672 = vadd.s32 %v664, 1024
      %v673 = vadd.s32 %v664, 1152
      %s674 = smul.u32 %s22, 1280
      %v675 = vstv %s674
      %v676 = vadd.s32 %v664, %v675
      %v677 = vadd.s32 %v665, %v675
      %v678 = vadd.s32 %v666, %v675
      %v679 = vadd.s32 %v667, %v675
      %v680 = vadd.s32 %v668, %v675
      %v681 = vadd.s32 %v669, %v675
      %v682 = vadd.s32 %v670, %v675
      %v683 = vadd.s32 %v671, %v675
      %v684 = vadd.s32 %v672, %v675
      %v685 = vadd.s32 %v673, %v675
      %vm686 = vcmp.lt.s32.totalorder %v676, 1200
      %vm687 = vcmp.lt.s32.totalorder %v677, 1200
      %vm688 = vcmp.lt.s32.totalorder %v678, 1200
      %vm689 = vcmp.lt.s32.totalorder %v679, 1200
      %vm690 = vcmp.lt.s32.totalorder %v680, 1200
      %vm691 = vcmp.lt.s32.totalorder %v681, 1200
      %vm692 = vcmp.lt.s32.totalorder %v682, 1200
      %vm693 = vcmp.lt.s32.totalorder %v683, 1200
      %vm694 = vcmp.lt.s32.totalorder %v684, 1200
      %vm695 = vcmp.lt.s32.totalorder %v685, 1200
      %v696 = vsub.f32 0.0, %v653
      %v697 = vsub.f32 0.0, %v654
      %v698 = vsub.f32 0.0, %v655
      %v699 = vsub.f32 0.0, %v656
      %v700 = vsub.f32 0.0, %v657
      %v701 = vsub.f32 0.0, %v658
      %v702 = vsub.f32 0.0, %v659
      %v703 = vsub.f32 0.0, %v660
      %v704 = vsub.f32 0.0, %v661
      %v705 = vsub.f32 0.0, %v662
      %v706 = vsel %vm686, %v696, inf
      %v707 = vsel %vm687, %v697, inf
      %v708 = vsel %vm688, %v698, inf
      %v709 = vsel %vm689, %v699, inf
      %v710 = vsel %vm690, %v700, inf
      %v711 = vsel %vm691, %v701, inf
      %v712 = vsel %vm692, %v702, inf
      %v713 = vsel %vm693, %v703, inf
      %v714 = vsel %vm694, %v704, inf
      %v715 = vsel %vm695, %v705, inf
      %v726 = vcombine.low %v706, %v707
      %v727 = vcombine.low %v708, %v709
      %v728 = vcombine.low %v710, %v711
      %v729 = vcombine.low %v712, %v713
      %v731 = vunpack.c.l.s4 1966171168
      %v732 = vunpack.c.0.s8 %v731
      %v733 = vlaneseq
      %v734 = vshrl.u32 %v733, 7
      %v735 = vsub.s32 %v732, %v734
      %v736 = vrot.slane %v726, %v735
      %v738 = vunpack.c.l.s4 1966171168
      %v739 = vunpack.c.0.s8 %v738
      %v740 = vlaneseq
      %v741 = vshrl.u32 %v740, 7
      %v742 = vsub.s32 %v739, %v741
      %v743 = vrot.slane %v727, %v742
      %v745 = vunpack.c.l.s4 1966171168
      %v746 = vunpack.c.0.s8 %v745
      %v747 = vlaneseq
      %v748 = vshrl.u32 %v747, 7
      %v749 = vsub.s32 %v746, %v748
      %v750 = vrot.slane %v728, %v749
      %v752 = vunpack.c.l.s4 1966171168
      %v753 = vunpack.c.0.s8 %v752
      %v754 = vlaneseq
      %v755 = vshrl.u32 %v754, 7
      %v756 = vsub.s32 %v753, %v755
      %v757 = vrot.slane %v729, %v756
      %v758 = vcombine.low %v736, %v743
      %v759 = vcombine.low %v750, %v757
      %v761 = vunpack.c.l.s4 1966171168
      %v762 = vunpack.c.0.s8 %v761
      %v763 = vlaneseq
      %v764 = vshrl.u32 %v763, 7
      %v765 = vsub.s32 %v762, %v764
      %v766 = vrot.slane %v758, %v765
      %v768 = vunpack.c.l.s4 1966171168
      %v769 = vunpack.c.0.s8 %v768
      %v770 = vlaneseq
      %v771 = vshrl.u32 %v770, 7
      %v772 = vsub.s32 %v769, %v771
      %v773 = vrot.slane %v759, %v772
      %v774 = vcombine.low %v766, %v773
      %v775 = vcombine.low %v714, %v715
      %v777 = vunpack.c.l.s4 1966171168
      %v778 = vunpack.c.0.s8 %v777
      %v779 = vlaneseq
      %v780 = vshrl.u32 %v779, 7
      %v781 = vsub.s32 %v778, %v780
      %v782 = vrot.slane %v775, %v781
      %v784 = vunpack.c.l.s4 1966171168
      %v785 = vunpack.c.0.s8 %v784
      %v786 = vlaneseq
      %v787 = vshrl.u32 %v786, 7
      %v788 = vsub.s32 %v785, %v787
      %v789 = vrot.slane %v782, %v788
      %792 = vst [vmem:[%s335] sm:$0xff] %v774
      %v793 = vlaneseq
      %vm794 = vcmp.ge.s32.totalorder %v793, 0
      %vm795 = vcmp.lt.s32.totalorder %v793, 256
      %vm796 = vmand %vm794, %vm795
      %797 = vst.msk [vmem:[%s335 + $0x8] sm:$0x3] %vm796, %v789
      %v808 = vcombine.low %v513, %v514
      %v809 = vcombine.low %v515, %v516
      %v810 = vcombine.low %v517, %v518
      %v811 = vcombine.low %v519, %v520
      %v813 = vunpack.c.l.s4 1966171168
      %v814 = vunpack.c.0.s8 %v813
      %v815 = vlaneseq
      %v816 = vshrl.u32 %v815, 7
      %v817 = vsub.s32 %v814, %v816
      %v818 = vrot.slane %v808, %v817
      %v820 = vunpack.c.l.s4 1966171168
      %v821 = vunpack.c.0.s8 %v820
      %v822 = vlaneseq
      %v823 = vshrl.u32 %v822, 7
      %v824 = vsub.s32 %v821, %v823
      %v825 = vrot.slane %v809, %v824
      %v827 = vunpack.c.l.s4 1966171168
      %v828 = vunpack.c.0.s8 %v827
      %v829 = vlaneseq
      %v830 = vshrl.u32 %v829, 7
      %v831 = vsub.s32 %v828, %v830
      %v832 = vrot.slane %v810, %v831
      %v834 = vunpack.c.l.s4 1966171168
      %v835 = vunpack.c.0.s8 %v834
      %v836 = vlaneseq
      %v837 = vshrl.u32 %v836, 7
      %v838 = vsub.s32 %v835, %v837
      %v839 = vrot.slane %v811, %v838
      %v840 = vcombine.low %v818, %v825
      %v841 = vcombine.low %v832, %v839
      %v843 = vunpack.c.l.s4 1966171168
      %v844 = vunpack.c.0.s8 %v843
      %v845 = vlaneseq
      %v846 = vshrl.u32 %v845, 7
      %v847 = vsub.s32 %v844, %v846
      %v848 = vrot.slane %v840, %v847
      %v850 = vunpack.c.l.s4 1966171168
      %v851 = vunpack.c.0.s8 %v850
      %v852 = vlaneseq
      %v853 = vshrl.u32 %v852, 7
      %v854 = vsub.s32 %v851, %v853
      %v855 = vrot.slane %v841, %v854
      %v856 = vcombine.low %v848, %v855
      %v857 = vcombine.low %v521, %v522
      %v859 = vunpack.c.l.s4 1966171168
      %v860 = vunpack.c.0.s8 %v859
      %v861 = vlaneseq
      %v862 = vshrl.u32 %v861, 7
      %v863 = vsub.s32 %v860, %v862
      %v864 = vrot.slane %v857, %v863
      %v866 = vunpack.c.l.s4 1966171168
      %v867 = vunpack.c.0.s8 %v866
      %v868 = vlaneseq
      %v869 = vshrl.u32 %v868, 7
      %v870 = vsub.s32 %v867, %v869
      %v871 = vrot.slane %v864, %v870
      %874 = vst [vmem:[%s326] sm:$0xff] %v856
      %875 = vst.msk [vmem:[%s326 + $0x8] sm:$0x3] %vm796, %v871
      %v878 = vlaneseq
      %v879 = vshrl.u32 %v878, 7
      %v880 = vsub.s32 0, %v879
      %v881 = vrot.slane %v529, %v880
      %v882 = vlaneseq
      %v883 = vshrl.u32 %v882, 7
      %v884 = vsub.s32 1, %v883
      %v885 = vrot.slane %v529, %v884
      %v886 = vlaneseq
      %v887 = vshrl.u32 %v886, 7
      %v888 = vsub.s32 2, %v887
      %v889 = vrot.slane %v529, %v888
      %v890 = vlaneseq
      %v891 = vshrl.u32 %v890, 7
      %v892 = vsub.s32 3, %v891
      %v893 = vrot.slane %v529, %v892
      %v894 = vlaneseq
      %v895 = vshrl.u32 %v894, 7
      %v896 = vsub.s32 4, %v895
      %v897 = vrot.slane %v529, %v896
      %v898 = vlaneseq
      %v899 = vshrl.u32 %v898, 7
      %v900 = vsub.s32 5, %v899
      %v901 = vrot.slane %v529, %v900
      %v902 = vlaneseq
      %v903 = vshrl.u32 %v902, 7
      %v904 = vsub.s32 6, %v903
      %v905 = vrot.slane %v529, %v904
      %v906 = vlaneseq
      %v907 = vshrl.u32 %v906, 7
      %v908 = vsub.s32 7, %v907
      %v909 = vrot.slane %v529, %v908
      %v910 = vlaneseq
      %v911 = vshrl.u32 %v910, 7
      %v912 = vsub.s32 0, %v911
      %v913 = vrot.slane %v530, %v912
      %v914 = vlaneseq
      %v915 = vshrl.u32 %v914, 7
      %v916 = vsub.s32 1, %v915
      %v917 = vrot.slane %v530, %v916
      %vm928 = vcmask 1040384
      %v929 = vsel %vm928, %v881, 0.0
      %v930 = vsel %vm928, %v885, 0.0
      %v931 = vadd.f32 %v929, %v930
      %v932 = vsel %vm928, %v889, 0.0
      %v933 = vadd.f32 %v931, %v932
      %v934 = vsel %vm928, %v893, 0.0
      %v935 = vadd.f32 %v933, %v934
      %v936 = vsel %vm928, %v897, 0.0
      %v937 = vadd.f32 %v935, %v936
      %v938 = vsel %vm928, %v901, 0.0
      %v939 = vadd.f32 %v937, %v938
      %v940 = vsel %vm928, %v905, 0.0
      %v941 = vadd.f32 %v939, %v940
      %v942 = vsel %vm928, %v909, 0.0
      %v943 = vadd.f32 %v941, %v942
      %v944 = vsel %vm928, %v913, 0.0
      %v945 = vadd.f32 %v943, %v944
      %v946 = vsel %vm928, %v917, 0.0
      %v947 = vadd.f32 %v945, %v946
      %948 = vadd.xlane.f32.xlu0 %v947
      %v949 = vpop.xlane.xlu0 %948
      %v950 = vrot.slane %v949, 4
      %v951 = vadd.f32 %v949, %v950
      %v952 = vrot.slane %v951, 2
      %v953 = vadd.f32 %v951, %v952
      %v954 = vrot.slane %v953, 1
      %v955 = vadd.f32 %v953, %v954
      %s956 = vtos %v955
      %v957 = vstv %s956
      %vm958 = vcmask 0
      %959 = vst.msk [vmem:[%s342] sm:$0x1] %vm958, %v957
      %v960 = vmul.f32 %v513, %v881
      %v961 = vmul.f32 %v514, %v885
      %v962 = vmul.f32 %v515, %v889
      %v963 = vmul.f32 %v516, %v893
      %v964 = vmul.f32 %v517, %v897
      %v965 = vmul.f32 %v518, %v901
      %v966 = vmul.f32 %v519, %v905
      %v967 = vmul.f32 %v520, %v909
      %v968 = vmul.f32 %v521, %v913
      %v969 = vmul.f32 %v522, %v917
      %v970 = vsel %vm928, %v960, 0.0
      %v971 = vsel %vm928, %v961, 0.0
      %v972 = vadd.f32 %v970, %v971
      %v973 = vsel %vm928, %v962, 0.0
      %v974 = vadd.f32 %v972, %v973
      %v975 = vsel %vm928, %v963, 0.0
      %v976 = vadd.f32 %v974, %v975
      %v977 = vsel %vm928, %v964, 0.0
      %v978 = vadd.f32 %v976, %v977
      %v979 = vsel %vm928, %v965, 0.0
      %v980 = vadd.f32 %v978, %v979
      %v981 = vsel %vm928, %v966, 0.0
      %v982 = vadd.f32 %v980, %v981
      %v983 = vsel %vm928, %v967, 0.0
      %v984 = vadd.f32 %v982, %v983
      %v985 = vsel %vm928, %v968, 0.0
      %v986 = vadd.f32 %v984, %v985
      %v987 = vsel %vm928, %v969, 0.0
      %v988 = vadd.f32 %v986, %v987
      %989 = vadd.xlane.f32.xlu0 %v988
      %v990 = vpop.xlane.xlu0 %989
      %v991 = vrot.slane %v990, 4
      %v992 = vadd.f32 %v990, %v991
      %v993 = vrot.slane %v992, 2
      %v994 = vadd.f32 %v992, %v993
      %v995 = vrot.slane %v994, 1
      %v996 = vadd.f32 %v994, %v995
      %s997 = vtos %v996
      %v998 = vstv %s997
      %999 = vst.msk [vmem:[%s348] sm:$0x1] %vm958, %v998
      %s1000 = smul.u32 10, %s22
      %p1001 = scmp.lt.s32.totalorder %s21, 1
      %s1002 = scalar_select %p1001, %s21, 1
      %p1003 = scmp.lt.s32.totalorder %s1000, 9
      %s1004 = scalar_select %p1003, %s1000, 9
      %s1005 = smul.addr %s1002, 10
      %s1006 = sadd.s32 %s1004, %s1005
      %s1007 = scalar_lea.vmem %s2, %s1006
      %s1008 = smul.u32 10, %s22
      %p1009 = scmp.lt.s32.totalorder %s21, 1
      %s1010 = scalar_select %p1009, %s21, 1
      %p1011 = scmp.lt.s32.totalorder %s1008, 9
      %s1012 = scalar_select %p1011, %s1008, 9
      %s1013 = smul.addr %s1010, 10
      %s1014 = sadd.s32 %s1012, %s1013
      %s1015 = scalar_lea.vmem %s3, %s1014
      %p1016 = scmp.lt.s32.totalorder %s21, 1
      %s1017 = scalar_select %p1016, %s21, 1
      %p1018 = scmp.lt.s32.totalorder %s22, 0
      %s1019 = scalar_select %p1018, %s22, 0
      %s1020 = sadd.s32 %s1019, %s1017
      %s1021 = scalar_lea.vmem %s4, %s1020
      %p1022 = scmp.lt.s32.totalorder %s21, 1
      %s1023 = scalar_select %p1022, %s21, 1
      %p1024 = scmp.lt.s32.totalorder %s22, 0
      %s1025 = scalar_select %p1024, %s22, 0
      %s1026 = sadd.s32 %s1025, %s1023
      %s1027 = scalar_lea.vmem %s5, %s1026
      // Predicated region
      $region29: #{confidence_loss.1} parent=27 // pred_check
        %p1028 = pneg %p105
      $region30: #{confidence_loss.1} parent=27 // pred_check_branch
        %1030 = sbr.rel (%p1028) target = $region32
      $region31: #{confidence_loss.1} parent=27 // pred_region
        %s1031 = smul.u32 10, %s22
      $region32: #{confidence_loss.1} parent=27 // pred_fallthru
        _
      // Predicated region
      $region33: #{confidence_loss.1} parent=27 // pred_check
        %p1032 = pneg %p133
      $region34: #{confidence_loss.1} parent=27 // pred_check_branch
        %1034 = sbr.rel (%p1032) target = $region36
      $region35: #{confidence_loss.1} parent=27 // pred_region
        %s1035 = smul.u32 10, %s22
      $region36: #{confidence_loss.1} parent=27 // pred_fallthru
        _
      // Predicated region
      $region37: #{confidence_loss.1} parent=27 // pred_check
        %p1036 = pneg %p161
      $region38: #{confidence_loss.1} parent=27 // pred_check_branch
        %1038 = sbr.rel (%p1036) target = $region40
      $region39: #{confidence_loss.1} parent=27 // pred_region
        _
      $region40: #{confidence_loss.1} parent=27 // pred_fallthru
        _
      // Predicated region
      $region41: #{confidence_loss.1} parent=27 // pred_check
        %p1039 = pneg %p189
      $region42: #{confidence_loss.1} parent=27 // pred_check_branch
        %1041 = sbr.rel (%p1039) target = $region44
      $region43: #{confidence_loss.1} parent=27 // pred_region
        _
      $region44: #{confidence_loss.1} parent=27 // pred_fallthru
        _
    $region28: #{confidence_loss.1} parent=5 // pred_fallthru
      _
    %p1042 = scmp.le.s32.totalorder 2, %s12
    // Predicated region
    $region45: #{confidence_loss.1} parent=5 // pred_check
      %p1043 = pneg %p1042
    $region46: #{confidence_loss.1} parent=5 // pred_check_branch
      %1045 = sbr.rel (%p1043) target = $region48
    $region47: #{confidence_loss.1} parent=5 // pred_region
      %s1046 = ssub.s32 %s12, 2
      // Predicated region
      $region49: #{confidence_loss.1} parent=47 // pred_check
        %p1047 = pneg %p111
      $region50: #{confidence_loss.1} parent=47 // pred_check_branch
        %1049 = sbr.rel (%p1047) target = $region52
      $region51: #{confidence_loss.1} parent=47 // pred_region
        %s1050 = smul.u32 10, %s24
        %p1051 = scmp.lt.s32.totalorder %s23, 1
        %s1052 = scalar_select %p1051, %s23, 1
        %p1053 = scmp.lt.s32.totalorder %s1050, 9
        %s1054 = scalar_select %p1053, %s1050, 9
        %s1055 = smul.addr %s1052, 10
        %s1056 = sadd.s32 %s1054, %s1055
        %s1057 = scalar_lea.vmem %s2, %s1056
      $region52: #{confidence_loss.1} parent=47 // pred_fallthru
        _
      // Predicated region
      $region53: #{confidence_loss.1} parent=47 // pred_check
        %p1058 = pneg %p139
      $region54: #{confidence_loss.1} parent=47 // pred_check_branch
        %1060 = sbr.rel (%p1058) target = $region56
      $region55: #{confidence_loss.1} parent=47 // pred_region
        %s1061 = smul.u32 10, %s24
        %p1062 = scmp.lt.s32.totalorder %s23, 1
        %s1063 = scalar_select %p1062, %s23, 1
        %p1064 = scmp.lt.s32.totalorder %s1061, 9
        %s1065 = scalar_select %p1064, %s1061, 9
        %s1066 = smul.addr %s1063, 10
        %s1067 = sadd.s32 %s1065, %s1066
        %s1068 = scalar_lea.vmem %s3, %s1067
      $region56: #{confidence_loss.1} parent=47 // pred_fallthru
        _
      // Predicated region
      $region57: #{confidence_loss.1} parent=47 // pred_check
        %p1069 = pneg %p167
      $region58: #{confidence_loss.1} parent=47 // pred_check_branch
        %1071 = sbr.rel (%p1069) target = $region60
      $region59: #{confidence_loss.1} parent=47 // pred_region
        %p1072 = scmp.lt.s32.totalorder %s23, 1
        %s1073 = scalar_select %p1072, %s23, 1
        %p1074 = scmp.lt.s32.totalorder %s24, 0
        %s1075 = scalar_select %p1074, %s24, 0
        %s1076 = sadd.s32 %s1075, %s1073
        %s1077 = scalar_lea.vmem %s4, %s1076
      $region60: #{confidence_loss.1} parent=47 // pred_fallthru
        _
      // Predicated region
      $region61: #{confidence_loss.1} parent=47 // pred_check
        %p1078 = pneg %p195
      $region62: #{confidence_loss.1} parent=47 // pred_check_branch
        %1080 = sbr.rel (%p1078) target = $region64
      $region63: #{confidence_loss.1} parent=47 // pred_region
        %p1081 = scmp.lt.s32.totalorder %s23, 1
        %s1082 = scalar_select %p1081, %s23, 1
        %p1083 = scmp.lt.s32.totalorder %s24, 0
        %s1084 = scalar_select %p1083, %s24, 0
        %s1085 = sadd.s32 %s1084, %s1082
        %s1086 = scalar_lea.vmem %s5, %s1085
      $region64: #{confidence_loss.1} parent=47 // pred_fallthru
        _
    $region48: #{confidence_loss.1} parent=5 // pred_fallthru
      _
  $region6: #{confidence_loss.1} parent=0 // loop_footer
    %s16 = sadd.s32 1, %s12
  $region7: #{confidence_loss.1} parent=0 // loop_footer_branch
    %11 = sbr.rel target = $region3
  $region8: #{confidence_loss.1} parent=0 // loop_exit
    _

</llo_original>
